<compile_context>
chip_gen: v5e
topology: v5e:2x2
jax: 0.10.0
libtpu: 0.0.40
codegen_flags: <defaults>
</compile_context>

<pallas_src>
import math

import jax
import jax.numpy as jnp
from jax import lax
from jax.experimental import pallas as pl
from jax.experimental.pallas import tpu as pltpu


_LANE = 128
_UNROLL_MAX = 8        # static unroll of the hidden stack up to this depth


def _round_up(x, m):
    return ((x + m - 1) // m) * m


def _cdiv(a, b):
    return -(-a // b)


def _resident(shape):
    """BlockSpec for a weight that stays resident in VMEM across grid steps.

    Constant index map + single buffering (the block never changes, so the
    default double-buffer would just waste VMEM).
    """
    zeros = (0,) * len(shape)
    return pl.BlockSpec(shape, lambda i: zeros, pipeline_mode=pl.Buffered(1))


def _pick_vmem_limit():
    """~48 MiB on v7x (64 MiB/TC), ~96 MiB on v5e/v6e (128 MiB)."""
    try:
        cap = int(pltpu.get_tpu_info().vmem_capacity_bytes)
    except Exception:
        cap = 64 * 1024 * 1024
    return max(32 * 1024 * 1024, min(96 * 1024 * 1024, (cap * 3) // 4))


def _make_kernel(num_hidden_layer, output_size):
    def kernel(*refs):
        x_ref, w_in_ref, b_in_ref = refs[0], refs[1], refs[2]
        if num_hidden_layer > 0:
            w_hid_ref, b_hid_ref = refs[3], refs[4]
            w_out_ref, b_out_ref, out_ref = refs[5], refs[6], refs[7]
        else:
            w_out_ref, b_out_ref, out_ref = refs[3], refs[4], refs[5]

        # linear_in + ReLU (MXU: bf16 operands, f32 accumulation). The bf16
        # cast of x happens in-kernel, fused with the already-pipelined load.
        h = jnp.dot(x_ref[...].astype(jnp.bfloat16), w_in_ref[...],
                    preferred_element_type=jnp.float32) + b_in_ref[...]
        h = jnp.maximum(h, 0.0)

        if num_hidden_layer > 0:
            if num_hidden_layer <= _UNROLL_MAX:
                # short stacks: static unroll schedules best
                for l in range(num_hidden_layer):
                    h = jnp.dot(h.astype(jnp.bfloat16), w_hid_ref[l],
                                preferred_element_type=jnp.float32) + b_hid_ref[l]
                    h = jnp.maximum(h, 0.0)
            else:
                # deep stacks: fori_loop bounds live ranges / code size
                def body(l, h):
                    h = jnp.dot(h.astype(jnp.bfloat16), w_hid_ref[l],
                                preferred_element_type=jnp.float32) + b_hid_ref[l]
                    return jnp.maximum(h, 0.0)
                h = lax.fori_loop(0, num_hidden_layer, body, h)

        # linear_out
        if output_size == 1:
            # Transposed MXU contraction: (1,H) x (TB,H) contracting H -> (1,TB).
            # Result is lane-dense over the batch (unmasked full-lane store) and
            # nothing touches the XLU.
            v = lax.dot_general(
                w_out_ref[...], h.astype(jnp.bfloat16),
                dimension_numbers=(((1,), (1,)), ((), ())),
                preferred_element_type=jnp.float32)
            out_ref[...] = v + b_out_ref[0]
        else:
            # w_out/b_out columns were padded to a multiple of 128 at prepare
            # time, so this store is also lane-dense.
            out_ref[...] = (
                jnp.dot(h.astype(jnp.bfloat16), w_out_ref[...],
                        preferred_element_type=jnp.float32) + b_out_ref[...]
            )

    return kernel


def critic_forward(x, prepared, *, num_hidden_layer, output_size, tile_b=512):
    """x: [B, input_size] float32. Returns [B, output_size] float32."""
    B, d_in = x.shape
    H = prepared["w_in"].shape[1]

    # --- batch tile selection -------------------------------------------------
    # Aim for >=2 grid steps (v7x megacore shards the "parallel" batch axis),
    # 16-row granularity for bf16 activations, and — for the output_size==1
    # lane-dense output tile (1, tb) — either a single full-extent block or a
    # tb that is a multiple of 128.
    if output_size == 1:
        if B <= _LANE:
            tb = _round_up(max(B, 1), 16)                  # single grid step
        else:
            tb = min(_round_up(tile_b, _LANE),
                     _round_up(_cdiv(B, 2), _LANE))
    else:
        tb = min(tile_b, max(16, _round_up(_cdiv(B, 2), 16)))
    b_pad = _round_up(B, tb)
    xb = x if b_pad == B else jnp.pad(x, ((0, b_pad - B), (0, 0)))
    grid = (b_pad // tb,)

    args = [xb, prepared["w_in"], prepared["b_in"]]
    in_specs = [
        pl.BlockSpec((tb, d_in), lambda i: (i, 0)),   # batch-tiled (pipelined)
        _resident((d_in, H)),
        _resident((1, H)),
    ]
    if num_hidden_layer > 0:
        L = num_hidden_layer
        # TODO(synk): if L*H*H bf16 approaches the VMEM limit (relevant on v7x's
        # 64 MiB), stream hidden weights per-layer instead of keeping the whole
        # (L,H,H) stack resident.
        args += [prepared["w_hid"], prepared["b_hid"]]
        in_specs += [_resident((L, H, H)), _resident((L, 1, H))]
    args += [prepared["w_out"], prepared["b_out"]]

    if output_size == 1:
        in_specs += [
            _resident((1, H)),                                   # w_out (bf16)
            pl.BlockSpec(memory_space=pltpu.MemorySpace.SMEM),   # scalar bias
        ]
        out_specs = pl.BlockSpec((1, tb), lambda i: (0, i))      # lane-dense
        out_shape = jax.ShapeDtypeStruct((1, b_pad), jnp.float32)
        out_bytes = b_pad * 4
    else:
        n_pad = prepared["w_out"].shape[1]                       # 128-padded cols
        in_specs += [_resident((H, n_pad)), _resident((1, n_pad))]
        out_specs = pl.BlockSpec((tb, n_pad), lambda i: (i, 0))
        out_shape = jax.ShapeDtypeStruct((b_pad, n_pad), jnp.float32)
        out_bytes = b_pad * n_pad * 4

    flops = 2 * b_pad * (d_in * H + num_hidden_layer * H * H + H * output_size)
    bytes_accessed = (
        int(xb.size) * 4
        + sum(int(a.size) * a.dtype.itemsize for a in args[1:])
        + out_bytes
    )

    out = pl.pallas_call(
        _make_kernel(num_hidden_layer, output_size),
        grid=grid,
        in_specs=in_specs,
        out_specs=out_specs,
        out_shape=out_shape,
        compiler_params=pltpu.CompilerParams(
            dimension_semantics=("parallel",),       # megacore sharding on v7x
            vmem_limit_bytes=_pick_vmem_limit(),
        ),
        cost_estimate=pl.CostEstimate(
            flops=flops, transcendentals=0, bytes_accessed=bytes_accessed),
    )(*args)

    if output_size == 1:
        return out.reshape(b_pad, 1)[:B]
    return out[:B, :output_size]


def init_params(key, input_size, output_size, hidden_size, num_hidden_layer=0):
    """Default PyTorch nn.Linear init: W, b ~ U(-1/sqrt(fan_in), 1/sqrt(fan_in)).
    Weights are stored transposed, i.e. (in_features, out_features)."""
    def linear(k, fan_in, fan_out):
        kw, kb = jax.random.split(k)
        bound = 1.0 / math.sqrt(fan_in)
        w = jax.random.uniform(kw, (fan_in, fan_out), jnp.float32, -bound, bound)
        b = jax.random.uniform(kb, (1, fan_out), jnp.float32, -bound, bound)
        return w, b

    keys = jax.random.split(key, 2 + max(num_hidden_layer, 0))
    w_in, b_in = linear(keys[0], input_size, hidden_size)
    w_out, b_out = linear(keys[1], hidden_size, output_size)
    params = {"w_in": w_in, "b_in": b_in, "w_out": w_out, "b_out": b_out}
    if num_hidden_layer > 0:
        ws, bs = [], []
        for l in range(num_hidden_layer):
            w, b = linear(keys[2 + l], hidden_size, hidden_size)
            ws.append(w)
            bs.append(b)
        params["w_hid"] = jnp.stack(ws)   # (L, H, H)
        params["b_hid"] = jnp.stack(bs)   # (L, 1, H)
    return params


def prepare_params(params, num_hidden_layer, output_size):
    """One-time prep: bf16 weight cast, head layout (out==1) / column padding
    to 128 lanes (1 < out < 128) for lane-dense stores."""
    prepared = {
        "w_in": params["w_in"].astype(jnp.bfloat16),
        "b_in": params["b_in"],                      # f32, added post-accumulation
    }
    if num_hidden_layer > 0:
        prepared["w_hid"] = params["w_hid"].astype(jnp.bfloat16)
        prepared["b_hid"] = params["b_hid"]
    if output_size == 1:
        prepared["w_out"] = params["w_out"].reshape(1, -1).astype(jnp.bfloat16)
        prepared["b_out"] = params["b_out"].reshape(-1)          # (1,) f32 -> SMEM
    else:
        n_pad = _round_up(output_size, _LANE)
        w = params["w_out"].astype(jnp.bfloat16)
        b = params["b_out"]
        if n_pad != output_size:
            w = jnp.pad(w, ((0, 0), (0, n_pad - output_size)))
            b = jnp.pad(b, ((0, 0), (0, n_pad - output_size)))
        prepared["w_out"] = w                                    # (H, n_pad) bf16
        prepared["b_out"] = b                                    # (1, n_pad) f32
    return prepared


def reference_forward(x, params, num_hidden_layer, output_size):
    """Pure-JAX reference matching the kernel's bf16-operand / f32-accum math."""
    bf = lambda a: a.astype(jnp.bfloat16).astype(jnp.float32)
    h = bf(x) @ bf(params["w_in"]) + params["b_in"]
    h = jnp.maximum(h, 0.0)
    for l in range(num_hidden_layer):
        h = bf(h) @ bf(params["w_hid"][l]) + params["b_hid"][l]
        h = jnp.maximum(h, 0.0)
    return bf(h) @ bf(params["w_out"]) + params["b_out"]


if __name__ == "__main__":
    key = jax.random.PRNGKey(0)
    kx, kp1, kp2 = jax.random.split(key, 3)

    input_size = 10
    hidden_size = 32
    batch = 6                      # not a multiple of 16 -> exercises padding
    x = jax.random.normal(kx, (batch, input_size), jnp.float32)

    # Case 1: critic head (output_size == 1) with one hidden layer.
    out_size, n_hid = 1, 1
    params = init_params(kp1, input_size, out_size, hidden_size, n_hid)
    prepared = prepare_params(params, n_hid, out_size)
    out = critic_forward(x, prepared, num_hidden_layer=n_hid, output_size=out_size)
    jax.block_until_ready(out)
    ref = reference_forward(x, params, n_hid, out_size)
    assert out.shape == (batch, out_size), out.shape
    assert jnp.allclose(out, ref, atol=2e-4, rtol=2e-4), \
        float(jnp.max(jnp.abs(out - ref)))

    # Case 2: output_size > 1 (exercises the 128-padded lane-dense output path),
    # no hidden layers.
    out_size2, n_hid2 = 3, 0
    params2 = init_params(kp2, input_size, out_size2, hidden_size, n_hid2)
    prepared2 = prepare_params(params2, n_hid2, out_size2)
    out2 = critic_forward(x, prepared2, num_hidden_layer=n_hid2, output_size=out_size2)
    jax.block_until_ready(out2)
    ref2 = reference_forward(x, params2, n_hid2, out_size2)
    assert out2.shape == (batch, out_size2), out2.shape
    assert jnp.allclose(out2, ref2, atol=2e-4, rtol=2e-4), \
        float(jnp.max(jnp.abs(out2 - ref2)))

    print("KERNEL_OK")
</pallas_src>

<mosaic_0001>
module attributes {stable_mosaic.version = 11 : i64} {
  func.func @kernel(%arg0: i32, %arg1: memref<16x10xf32, #tpu.memory_space<vmem>>, %arg2: memref<10x32xbf16, #tpu.memory_space<vmem>>, %arg3: memref<1x32xf32, #tpu.memory_space<vmem>>, %arg4: memref<1x32x32xbf16, #tpu.memory_space<vmem>>, %arg5: memref<1x1x32xf32, #tpu.memory_space<vmem>>, %arg6: memref<1x32xbf16, #tpu.memory_space<vmem>>, %arg7: memref<1xf32, #tpu.memory_space<smem>>, %arg8: memref<1x16xf32, #tpu.memory_space<vmem>>) attributes {dimension_semantics = [#tpu.dimension_semantics<parallel>], iteration_bounds = array<i64: 1>, scalar_prefetch = 0 : i64, scratch_operands = 0 : i64, tpu.core_type = #tpu.core_type<tc>, window_params = [{transform_indices = @transform_0, window_bounds = array<i64: 16, 10>}, {pipeline_mode = #tpu.pipeline_mode<synchronous>, transform_indices = @transform_1, window_bounds = array<i64: 10, 32>}, {pipeline_mode = #tpu.pipeline_mode<synchronous>, transform_indices = @transform_2, window_bounds = array<i64: 1, 32>}, {pipeline_mode = #tpu.pipeline_mode<synchronous>, transform_indices = @transform_3, window_bounds = array<i64: 1, 32, 32>}, {pipeline_mode = #tpu.pipeline_mode<synchronous>, transform_indices = @transform_4, window_bounds = array<i64: 1, 1, 32>}, {pipeline_mode = #tpu.pipeline_mode<synchronous>, transform_indices = @transform_5, window_bounds = array<i64: 1, 32>}, {transform_indices = @transform_6, window_bounds = array<i64: 1>}, {transform_indices = @transform_7, window_bounds = array<i64: 1, 16>}]} {
    %c0 = arith.constant 0 : index
    %c0_0 = arith.constant 0 : index
    %0 = vector.load %arg1[%c0, %c0_0] : memref<16x10xf32, #tpu.memory_space<vmem>>, vector<16x10xf32>
    %1 = arith.truncf %0 : vector<16x10xf32> to vector<16x10xbf16>
    %c0_1 = arith.constant 0 : index
    %c0_2 = arith.constant 0 : index
    %2 = vector.load %arg2[%c0_1, %c0_2] : memref<10x32xbf16, #tpu.memory_space<vmem>>, vector<10x32xbf16>
    %cst = arith.constant dense<0.000000e+00> : vector<16x32xf32>
    %3 = tpu.matmul %1, %2, %cst {dimension_numbers = #tpu.dot_dimension_numbers<[1], [0], [0], [1], [0, 0, 1, 1], [], []>} : vector<16x10xbf16>, vector<10x32xbf16>, vector<16x32xf32> -> vector<16x32xf32>
    %c0_3 = arith.constant 0 : index
    %c0_4 = arith.constant 0 : index
    %4 = vector.load %arg3[%c0_3, %c0_4] : memref<1x32xf32, #tpu.memory_space<vmem>>, vector<1x32xf32>
    %5 = vector.broadcast %4 : vector<1x32xf32> to vector<16x32xf32>
    %6 = arith.addf %3, %5 : vector<16x32xf32>
    %cst_5 = arith.constant 0.000000e+00 : f32
    %7 = vector.broadcast %cst_5 : f32 to vector<16x32xf32>
    %8 = arith.maximumf %6, %7 : vector<16x32xf32>
    %9 = arith.truncf %8 : vector<16x32xf32> to vector<16x32xbf16>
    %c0_6 = arith.constant 0 : index
    %c0_7 = arith.constant 0 : index
    %c0_8 = arith.constant 0 : index
    %10 = vector.load %arg4[%c0_6, %c0_7, %c0_8] : memref<1x32x32xbf16, #tpu.memory_space<vmem>>, vector<1x32x32xbf16>
    %11 = vector.shape_cast %10 : vector<1x32x32xbf16> to vector<32x32xbf16>
    %cst_9 = arith.constant dense<0.000000e+00> : vector<16x32xf32>
    %12 = tpu.matmul %9, %11, %cst_9 {dimension_numbers = #tpu.dot_dimension_numbers<[1], [0], [0], [1], [0, 0, 1, 1], [], []>} : vector<16x32xbf16>, vector<32x32xbf16>, vector<16x32xf32> -> vector<16x32xf32>
    %c0_10 = arith.constant 0 : index
    %c0_11 = arith.constant 0 : index
    %c0_12 = arith.constant 0 : index
    %13 = vector.load %arg5[%c0_10, %c0_11, %c0_12] : memref<1x1x32xf32, #tpu.memory_space<vmem>>, vector<1x1x32xf32>
    %14 = vector.shape_cast %13 : vector<1x1x32xf32> to vector<1x32xf32>
    %15 = vector.broadcast %14 : vector<1x32xf32> to vector<16x32xf32>
    %16 = arith.addf %12, %15 : vector<16x32xf32>
    %cst_13 = arith.constant 0.000000e+00 : f32
    %17 = vector.broadcast %cst_13 : f32 to vector<16x32xf32>
    %18 = arith.maximumf %16, %17 : vector<16x32xf32>
    %c0_14 = arith.constant 0 : index
    %c0_15 = arith.constant 0 : index
    %19 = vector.load %arg6[%c0_14, %c0_15] : memref<1x32xbf16, #tpu.memory_space<vmem>>, vector<1x32xbf16>
    %20 = arith.truncf %18 : vector<16x32xf32> to vector<16x32xbf16>
    %cst_16 = arith.constant dense<0.000000e+00> : vector<1x16xf32>
    %21 = tpu.matmul %19, %20, %cst_16 {dimension_numbers = #tpu.dot_dimension_numbers<[1], [1], [0], [0], [0, 0, 1, 0], [], []>} : vector<1x32xbf16>, vector<16x32xbf16>, vector<1x16xf32> -> vector<1x16xf32>
    %c0_17 = arith.constant 0 : index
    %22 = memref.load %arg7[%c0_17] : memref<1xf32, #tpu.memory_space<smem>>
    %23 = vector.broadcast %22 : f32 to vector<1x16xf32>
    %24 = arith.addf %21, %23 : vector<1x16xf32>
    %c0_18 = arith.constant 0 : index
    %c0_19 = arith.constant 0 : index
    %25 = vector.load %arg8[%c0_18, %c0_19] : memref<1x16xf32, #tpu.memory_space<vmem>>, vector<1x16xf32>
    tpu.vector_store %arg8[%c0_18, %c0_19], %24 {strides = array<i32>} : memref<1x16xf32, #tpu.memory_space<vmem>>, vector<1x16xf32>,
    return
  }
  func.func @transform_0(%arg0: i32) -> (i32, i32) {
    %c0_i32 = arith.constant 0 : i32
    %c0_i32_0 = arith.constant 0 : i32
    return %arg0, %c0_i32 : i32, i32
  }
  func.func @transform_1(%arg0: i32) -> (i32, i32) {
    %c0_i32 = arith.constant 0 : i32
    %c0_i32_0 = arith.constant 0 : i32
    %c0_i32_1 = arith.constant 0 : i32
    return %c0_i32, %c0_i32_0 : i32, i32
  }
  func.func @transform_2(%arg0: i32) -> (i32, i32) {
    %c0_i32 = arith.constant 0 : i32
    %c0_i32_0 = arith.constant 0 : i32
    %c0_i32_1 = arith.constant 0 : i32
    return %c0_i32, %c0_i32_0 : i32, i32
  }
  func.func @transform_3(%arg0: i32) -> (i32, i32, i32) {
    %c0_i32 = arith.constant 0 : i32
    %c0_i32_0 = arith.constant 0 : i32
    %c0_i32_1 = arith.constant 0 : i32
    %c0_i32_2 = arith.constant 0 : i32
    return %c0_i32, %c0_i32_0, %c0_i32_1 : i32, i32, i32
  }
  func.func @transform_4(%arg0: i32) -> (i32, i32, i32) {
    %c0_i32 = arith.constant 0 : i32
    %c0_i32_0 = arith.constant 0 : i32
    %c0_i32_1 = arith.constant 0 : i32
    %c0_i32_2 = arith.constant 0 : i32
    return %c0_i32, %c0_i32_0, %c0_i32_1 : i32, i32, i32
  }
  func.func @transform_5(%arg0: i32) -> (i32, i32) {
    %c0_i32 = arith.constant 0 : i32
    %c0_i32_0 = arith.constant 0 : i32
    %c0_i32_1 = arith.constant 0 : i32
    return %c0_i32, %c0_i32_0 : i32, i32
  }
  func.func @transform_6(%arg0: i32) -> i32 {
    %c0_i32 = arith.constant 0 : i32
    %c0_i32_0 = arith.constant 0 : i32
    return %c0_i32 : i32
  }
  func.func @transform_7(%arg0: i32) -> (i32, i32) {
    %c0_i32 = arith.constant 0 : i32
    %c0_i32_0 = arith.constant 0 : i32
    return %c0_i32, %arg0 : i32, i32
  }
}

</mosaic_0001>

<llo_original>
// kernel: tpu_custom_call.1
$region0: #{tpu_custom_call.1}
  #allocation0 [shape = 'u32[]', space=smem, size = 0x4, offset = 0x4, fixed_abs, tag = 'smem constant byte address 0x4 - core index']
  #allocation1 [shape = 'u32[72,128]{1,0:T(1,128)}', space=vmem, size = 0x9000, scoped, tag = 'internal scratch']
  #allocation2 [shape = 'f32[1]{0:T(128)S(6)}', space=smem, size = 0x200, scoped, tag = 'scoped memory for tpu_custom_call.1']
  %s0 = inlined_call_operand.hbm [shape: f32[16,10], index: 0, kind: input, shape index: {}]
  %s1 = inlined_call_operand.hbm [shape: bf16[10,32], index: 1, kind: input, shape index: {}]
  %s2 = inlined_call_operand.vmem [shape: f32[1,32], index: 2, kind: input, shape index: {}]
  %s3 = inlined_call_operand.hbm [shape: bf16[1,32,32], index: 3, kind: input, shape index: {}]
  %s4 = inlined_call_operand.vmem [shape: f32[1,1,32], index: 4, kind: input, shape index: {}]
  %s5 = inlined_call_operand.vmem [shape: bf16[1,32], index: 5, kind: input, shape index: {}]
  %s6 = inlined_call_operand.<no memory space> [shape: f32[1], index: 6, kind: input, shape index: {}]
  %s7 = inlined_call_operand.hbm [shape: f32[1,16], index: 7, kind: output, shape index: {}]
  %s8 = sld [smem:[#allocation0]]
  $region50: #{tpu_custom_call.1} parent=0
    _
  %s10 = ssub.s32 1, %s8
  %s11 = scalar_select 0, %s10, %s8
  %12 = sst [smem:[#allocation2]] %s6
  $region1: #{tpu_custom_call.1} parent=0
    #allocation3 [shape = 'u8[8192]{0}', space=vmem, size = 0x2000, scoped, tag = 'input window, operand 0, single buffered']
    #allocation4 [shape = 's32[1]{0}', space=sflag, size = 0x4, scoped, tag = 'scoped memory for tpu_custom_call.1']
    #allocation5 [shape = 's32[1]{0}', space=sflag, size = 0x4, scoped, tag = 'scoped memory for tpu_custom_call.1']
    #allocation6 [shape = 'u8[4096]{0}', space=vmem, size = 0x1000, scoped, tag = 'input window, operand 1, single buffered']
    #allocation7 [shape = 's32[1]{0}', space=sflag, size = 0x4, scoped, tag = 'scoped memory for tpu_custom_call.1']
    #allocation8 [shape = 'u8[8192]{0}', space=vmem, size = 0x2000, scoped, tag = 'input window, operand 3, single buffered']
    #allocation9 [shape = 'u8[512]{0}', space=vmem, size = 0x400, scoped, tag = 'output window, operand 0, single buffered']
    %13 = vsyncpa [#allocation4], 0
    %14 = vsyncpa [#allocation7], 0
    %15 = vsyncpa [#allocation5], 0
    // Predicated region
    $region2: #{tpu_custom_call.1} parent=1 // pred_check
      _
    $region3: #{tpu_custom_call.1} parent=1 // pred_check_branch
      %17 = sbr.rel (0) target = $region5
    $region4: #{tpu_custom_call.1} parent=1 // pred_region
      %19 = vsyncadd [#allocation4], 0
      %s20 = sshll.u32 %s0, 4
      %s21 = int_to_ptr.hbm [resolvable:$true] %s20
      %s22 = sshll.u32 [#allocation3], 4
      %s23 = int_to_ptr.vmem [resolvable:$true] %s22
      %28 = dma.hbm_to_vmem [thread:$0]  %s21, 256, %s23, [#allocation4], 128, 128, 8
    $region5: #{tpu_custom_call.1} parent=1 // pred_fallthru
      _
    // Predicated region
    $region6: #{tpu_custom_call.1} parent=1 // pred_check
      _
    $region7: #{tpu_custom_call.1} parent=1 // pred_check_branch
      %30 = sbr.rel (0) target = $region9
    $region8: #{tpu_custom_call.1} parent=1 // pred_region
      %32 = vsyncadd [#allocation7], 0
      %s33 = sshll.u32 %s1, 4
      %s34 = int_to_ptr.hbm [resolvable:$true] %s33
      %s35 = sshll.u32 [#allocation6], 4
      %s36 = int_to_ptr.vmem [resolvable:$true] %s35
      %41 = dma.hbm_to_vmem [thread:$0]  %s34, 128, %s36, [#allocation7], 64, 64, 4
    $region9: #{tpu_custom_call.1} parent=1 // pred_fallthru
      _
    // Predicated region
    $region10: #{tpu_custom_call.1} parent=1 // pred_check
      _
    $region11: #{tpu_custom_call.1} parent=1 // pred_check_branch
      %43 = sbr.rel (0) target = $region13
    $region12: #{tpu_custom_call.1} parent=1 // pred_region
      _
    $region13: #{tpu_custom_call.1} parent=1 // pred_fallthru
      _
    // Predicated region
    $region14: #{tpu_custom_call.1} parent=1 // pred_check
      _
    $region15: #{tpu_custom_call.1} parent=1 // pred_check_branch
      %45 = sbr.rel (0) target = $region17
    $region16: #{tpu_custom_call.1} parent=1 // pred_region
      %47 = vsyncadd [#allocation7], 0
      %s48 = sshll.u32 %s3, 4
      %s49 = int_to_ptr.hbm [resolvable:$true] %s48
      %s50 = sshll.u32 [#allocation8], 4
      %s51 = int_to_ptr.vmem [resolvable:$true] %s50
      %56 = dma.hbm_to_vmem [thread:$0]  %s49, 256, %s51, [#allocation7], 64, 64, 4
    $region17: #{tpu_custom_call.1} parent=1 // pred_fallthru
      _
    // Predicated region
    $region18: #{tpu_custom_call.1} parent=1 // pred_check
      _
    $region19: #{tpu_custom_call.1} parent=1 // pred_check_branch
      %58 = sbr.rel (0) target = $region21
    $region20: #{tpu_custom_call.1} parent=1 // pred_region
      _
    $region21: #{tpu_custom_call.1} parent=1 // pred_fallthru
      _
    // Predicated region
    $region22: #{tpu_custom_call.1} parent=1 // pred_check
      _
    $region23: #{tpu_custom_call.1} parent=1 // pred_check_branch
      %60 = sbr.rel (0) target = $region25
    $region24: #{tpu_custom_call.1} parent=1 // pred_region
      _
    $region25: #{tpu_custom_call.1} parent=1 // pred_fallthru
      _
    // Predicated region
    $region26: #{tpu_custom_call.1} parent=1 // pred_check
      _
    $region27: #{tpu_custom_call.1} parent=1 // pred_check_branch
      %62 = sbr.rel (0) target = $region29
    $region28: #{tpu_custom_call.1} parent=1 // pred_region
      _
    $region29: #{tpu_custom_call.1} parent=1 // pred_fallthru
      _
    // Predicated region
    $region30: #{tpu_custom_call.1} parent=1 // pred_check
      _
    $region31: #{tpu_custom_call.1} parent=1 // pred_check_branch
      %64 = sbr.rel (0) target = $region33
    $region32: #{tpu_custom_call.1} parent=1 // pred_region
      %66 = dma.done [#allocation4], 256
    $region33: #{tpu_custom_call.1} parent=1 // pred_fallthru
      _
    // Predicated region
    $region34: #{tpu_custom_call.1} parent=1 // pred_check
      _
    $region35: #{tpu_custom_call.1} parent=1 // pred_check_branch
      %68 = sbr.rel (0) target = $region37
    $region36: #{tpu_custom_call.1} parent=1 // pred_region
      %70 = dma.done [#allocation7], 128
    $region37: #{tpu_custom_call.1} parent=1 // pred_fallthru
      _
    // Predicated region
    $region38: #{tpu_custom_call.1} parent=1 // pred_check
      _
    $region39: #{tpu_custom_call.1} parent=1 // pred_check_branch
      %72 = sbr.rel (0) target = $region41
    $region40: #{tpu_custom_call.1} parent=1 // pred_region
      %74 = dma.done [#allocation7], 256
    $region41: #{tpu_custom_call.1} parent=1 // pred_fallthru
      _
    %v76 = vld [vmem:[#allocation3] sm:$0xff]
    %v77 = vld [vmem:[#allocation3 + $0x8] sm:$0xff]
    %v78 = vpack.c.bf16 %v77, %v76
    %v79 = vld [vmem:[#allocation6] sm:$0xf]
    %v80 = vld [vmem:[#allocation6 + $0x4] sm:$0x1]
    %v81 = vld [vmem:[%s2] sm:$0x1]
    %v83 = vperm.slane %v81, 0
    %v87 = vunpack.c.l.b16 %v79
    %v88 = vunpack.c.l.b16 %v80
    %v89 = vpack.c.b16 %v88, %v87
    %vm90 = vcmask 80896
    %v92 = vsel %vm90, %v78, 0
    %vm94 = vcmask 1044480
    %v96 = vsel %vm94, %v89, 0
    %98 = vmatpush.bf16.msra.mxu0 0
    %99 = vmatpush.bf16.msra.mxu0 0
    %100 = vmatpush.bf16.msra.mxu0 0
    %101 = vmatpush.bf16.msra.mxu0 0
    %102 = vmatpush.bf16.msra.mxu0 0
    %103 = vmatpush.bf16.msra.mxu0 0
    %104 = vmatpush.bf16.msra.mxu0 0
    %105 = vmatpush.bf16.msra.mxu0 %v96
    %106 = vmatmul.bf16.gmra.mxu0 %v92
    %v107 = vpop.f32.mrf.mxu0
    %v108 = vadd.f32 %v83, %v107
    %v109 = vpop.f32.mrf.mxu0
    %v110 = vadd.f32 %v83, %v109
    %111 = vdwg.mxu0
    %v112 = vmax.f32 %v108, 0.0
    %v113 = vmax.f32 %v110, 0.0
    %v114 = vpack.c.bf16 %v113, %v112
    %v115 = vld [vmem:[#allocation8] sm:$0xf]
    %v116 = vld [vmem:[#allocation8 + $0x4] sm:$0xf]
    %v117 = vld [vmem:[#allocation8 + $0x8] sm:$0xf]
    %v118 = vld [vmem:[#allocation8 + $0xc] sm:$0xf]
    %v119 = vld [vmem:[%s4] sm:$0x1]
    %v121 = vperm.slane %v119, 0
    %v127 = vunpack.c.l.b16 %v115
    %v128 = vunpack.c.l.b16 %v116
    %v129 = vunpack.c.l.b16 %v117
    %v130 = vunpack.c.l.b16 %v118
    %v131 = vpack.c.b16 %v128, %v127
    %v132 = vpack.c.b16 %v130, %v129
    %vm135 = vcmask 261120
    %v137 = vsel %vm135, %v114, 0
    %139 = vmatpush.bf16.msra.mxu0 0
    %140 = vmatpush.bf16.msra.mxu0 0
    %141 = vmatpush.bf16.msra.mxu0 0
    %142 = vmatpush.bf16.msra.mxu0 0
    %143 = vmatpush.bf16.msra.mxu0 0
    %144 = vmatpush.bf16.msra.mxu0 0
    %145 = vmatpush.bf16.msra.mxu0 %v132
    %146 = vmatpush.bf16.msra.mxu0 %v131
    %147 = vmatmul.bf16.gmra.mxu0 %v137
    %v148 = vpop.f32.mrf.mxu0
    %v149 = vadd.f32 %v121, %v148
    %v150 = vpop.f32.mrf.mxu0
    %v151 = vadd.f32 %v121, %v150
    %152 = vdwg.mxu0
    %v153 = vmax.f32 %v149, 0.0
    %v154 = vmax.f32 %v151, 0.0
    %v155 = vld [vmem:[%s5] sm:$0x1]
    %v156 = vpack.c.bf16 %v154, %v153
    %s157 = sld [smem:[#allocation2]]
    %v158 = vstv %s157
    %v160 = vsel %vm135, %v155, 0
    %v163 = vsel %vm135, %v156, 0
    %165 = vmatpush.bf16.xpose.msra.mxu0 0
    %166 = vmatpush.bf16.xpose.msra.mxu0 0
    %167 = vmatpush.bf16.xpose.msra.mxu0 0
    %168 = vmatpush.bf16.xpose.msra.mxu0 0
    %169 = vmatpush.bf16.xpose.msra.mxu0 0
    %170 = vmatpush.bf16.xpose.msra.mxu0 0
    %171 = vmatpush.bf16.xpose.msra.mxu0 0
    %172 = vmatpush.bf16.xpose.msra.mxu0 %v163
    %173 = vmatmul.bf16.gmra.mxu0 %v160
    %v174 = vpop.f32.mrf.mxu0
    %v175 = vadd.f32 %v158, %v174
    %v176 = vpop.f32.mrf.mxu0
    %177 = vdwg.mxu0
    %vm178 = vcmask 122880
    %179 = vst.msk [vmem:[#allocation9] sm:$0x1] %vm178, %v175
    // Predicated region
    $region42: #{tpu_custom_call.1} parent=1 // pred_check
      _
    $region43: #{tpu_custom_call.1} parent=1 // pred_check_branch
      %181 = sbr.rel (0) target = $region45
    $region44: #{tpu_custom_call.1} parent=1 // pred_region
      %183 = vsyncadd [#allocation5], 0
      %s185 = sshll.u32 [#allocation9], 4
      %s186 = int_to_ptr.vmem [resolvable:$true] %s185
      %s187 = sshll.u32 %s7, 4
      %s188 = int_to_ptr.hbm [resolvable:$true] %s187
      %190 = dma.vmem_to_hbm [thread:$0]  %s186, 16, %s188, [#allocation5]
    $region45: #{tpu_custom_call.1} parent=1 // pred_fallthru
      _
    // Predicated region
    $region46: #{tpu_custom_call.1} parent=1 // pred_check
      _
    $region47: #{tpu_custom_call.1} parent=1 // pred_check_branch
      %192 = sbr.rel (0) target = $region49
    $region48: #{tpu_custom_call.1} parent=1 // pred_region
      %194 = dma.done [#allocation5], 16
    $region49: #{tpu_custom_call.1} parent=1 // pred_fallthru
      _
    %195 = vsyncpa [#allocation4], 1
    %196 = vsyncpa [#allocation7], 1
    %197 = vsyncpa [#allocation5], 1

</llo_original>
